<compile_context>
chip_gen: v6e
topology: v6e:2x2x1
jax: 0.10.0
libtpu: 0.0.40
codegen_flags: <defaults>
</compile_context>

<pallas_src>
import functools
import math

import jax
import jax.numpy as jnp
from jax.experimental import pallas as pl
from jax.experimental.pallas import tpu as pltpu

_LANES = 128
_SUBLANES = 8
# Streaming working-set budget per tile (~1/3 of v7x's 64 MiB physical VMEM), leaving
# room for the resident weights/biases and compiler-internal scratch.
_BLOCK_M_VMEM_BUDGET = 24 * 1024 * 1024


def _round_up(x, m):
    return ((x + m - 1) // m) * m


def _mlp_kernel(x_ref, w1_ref, b1_ref, w2_ref, b2_ref, o_ref):
    # x_ref:  (tm, D_in)   w1_ref: (D_in, H)     b1_ref: (1, H)
    # w2_ref: (H, D_out_p) b2_ref: (1, D_out_p)  o_ref:  (tm, D_out_p)
    x = x_ref[...]
    h = jnp.dot(x, w1_ref[...], preferred_element_type=jnp.float32) + b1_ref[...]
    h = jnp.maximum(h, 0.0)                       # ReLU in the f32 accumulator (VPU)
    h = h.astype(w2_ref.dtype)                    # back to matmul dtype -> fast MXU path
    out = jnp.dot(h, w2_ref[...], preferred_element_type=jnp.float32) + b2_ref[...]
    o_ref[...] = out.astype(o_ref.dtype)


def _streaming_bytes(bm, d_in, hidden, d_out_p, compute_isz, out_isz):
    # Double-buffered x tile + double-buffered out tile + the f32 hidden intermediate.
    return (2 * bm * d_in * compute_isz
            + 2 * bm * d_out_p * out_isz
            + bm * hidden * 4)


def _choose_block_m(batch, d_in, hidden, d_out_p, compute_isz, out_isz):
    """Batch-tile choice: VMEM-aware, prefers >=2 tiles / even grids (v7x has 2 TCs)."""
    granule = 16 if compute_isz == 2 else _SUBLANES   # bf16 packs 16 rows per vreg

    def fits(bm):
        return _streaming_bytes(bm, d_in, hidden, d_out_p,
                                compute_isz, out_isz) <= _BLOCK_M_VMEM_BUDGET

    if batch < 32:
        # Single tile equal to the full batch: block == full dim is always legal,
        # no edge masking, and splitting this little work across cores is pure overhead.
        return batch

    if batch <= 256:
        # Two tiles so v7x's second TensorCore gets work; keep sublane packing.
        bm = _round_up(pl.cdiv(batch, 2), granule)
    else:
        # 512 rows already reach ~85% of the HBM roofline on the most bandwidth-starved
        # chip (v5e); 1024 buys <2% while doubling edge waste and VMEM footprint.
        candidates = [c for c in (512, 256) if fits(c) and pl.cdiv(batch, c) >= 2]
        even = [c for c in candidates if pl.cdiv(batch, c) % 2 == 0]
        if even:
            bm = even[0]          # even grid -> both v7x TCs get equal tile counts
        elif candidates:
            bm = candidates[0]
        else:
            bm = 128

    # Shrink until the streaming working set fits the per-core VMEM budget.
    while bm > granule and not fits(bm):
        bm = max(granule, _round_up(bm // 2, granule))
    return bm


@functools.partial(jax.jit, static_argnames=("block_m", "compute_dtype", "out_dtype"))
def mlp_forward(x, w1, b1, w2, b2, *, block_m=None,
                compute_dtype=jnp.bfloat16, out_dtype=None):
    B, d_in = x.shape
    hidden = w1.shape[1]
    d_out = w2.shape[1]

    out_dtype = x.dtype if out_dtype is None else jnp.dtype(out_dtype)
    compute_isz = jnp.dtype(compute_dtype).itemsize
    out_isz = jnp.dtype(out_dtype).itemsize

    # Conditional lane padding of the output feature dim: only when the relative byte
    # overhead is small. For tiny d_out (e.g. 16) masked stores beat 8x extra writeback.
    d_out_p = _round_up(d_out, _LANES)
    if d_out_p != d_out and not (d_out >= _LANES or d_out_p <= d_out * 1.25):
        d_out_p = d_out
    if d_out_p != d_out:
        w2 = jnp.pad(w2, ((0, 0), (0, d_out_p - d_out)))
        b2 = jnp.pad(b2, ((0, 0), (0, d_out_p - d_out)))

    if block_m is None:
        block_m = _choose_block_m(B, d_in, hidden, d_out_p, compute_isz, out_isz)

    # bf16 activations/weights (halves HBM bytes, fast MXU path on v6e/v7x);
    # biases stay f32 so the post-matmul elementwise path is pure f32.
    x = x.astype(compute_dtype)
    w1 = w1.astype(compute_dtype)
    w2 = w2.astype(compute_dtype)
    b1 = b1.astype(jnp.float32)
    b2 = b2.astype(jnp.float32)

    # No wrapper-side pad: Pallas masks the partial edge block.
    grid_m = pl.cdiv(B, block_m)

    def _bytes(shape, dtype):
        return math.prod(shape) * jnp.dtype(dtype).itemsize

    # tile_bytes already counts double buffers; ~1.25x headroom, 48 MiB cap so v7x
    # (64 MiB physical) keeps room for compiler-internal scratch.
    tile_bytes = (
        2 * _bytes((block_m, d_in), compute_dtype)
        + 2 * _bytes((block_m, d_out_p), out_dtype)
        + 2 * _bytes((d_in, hidden), compute_dtype)
        + 2 * _bytes((hidden, d_out_p), compute_dtype)
        + 2 * _bytes((1, hidden), jnp.float32)
        + 2 * _bytes((1, d_out_p), jnp.float32)
        + _bytes((block_m, hidden), jnp.float32)
    )
    vmem_limit = min(48 * 1024 * 1024, max(32 * 1024 * 1024, int(1.25 * tile_bytes)))

    cost = pl.CostEstimate(
        flops=2 * B * (d_in * hidden + hidden * d_out_p),
        transcendentals=0,
        bytes_accessed=(
            _bytes((B, d_in), compute_dtype)
            + _bytes((d_in, hidden), compute_dtype)
            + _bytes((hidden, d_out_p), compute_dtype)
            + _bytes((1, hidden), jnp.float32)
            + _bytes((1, d_out_p), jnp.float32)
            + _bytes((B, d_out_p), out_dtype)
        ),
    )

    # NOTE: memory-bound kernel (AI ~= 100 flops/byte at hidden=128). If an xprof trace
    # shows exposed DMA on the streaming x tile, add pipeline_mode=pl.Buffered(3) to
    # in_specs[0] only (weights/biases stay resident). On v7x, pltpu.CORE_PARALLEL on the
    # batch axis can be tried; verify in a trace that both TensorCores receive tiles.
    out = pl.pallas_call(
        _mlp_kernel,
        out_shape=jax.ShapeDtypeStruct((B, d_out_p), out_dtype),
        grid_spec=pltpu.PrefetchScalarGridSpec(
            num_scalar_prefetch=0,
            grid=(grid_m,),
            in_specs=[
                pl.BlockSpec((block_m, d_in), lambda i: (i, 0)),    # x tile (streams)
                pl.BlockSpec((d_in, hidden), lambda i: (0, 0)),     # w1 (resident)
                pl.BlockSpec((1, hidden), lambda i: (0, 0)),        # b1
                pl.BlockSpec((hidden, d_out_p), lambda i: (0, 0)),  # w2 (resident)
                pl.BlockSpec((1, d_out_p), lambda i: (0, 0)),       # b2
            ],
            out_specs=pl.BlockSpec((block_m, d_out_p), lambda i: (i, 0)),
        ),
        compiler_params=pltpu.CompilerParams(
            dimension_semantics=("parallel",),
            vmem_limit_bytes=vmem_limit,
        ),
        cost_estimate=cost,
    )(x, w1, b1, w2, b2)

    if d_out_p != d_out:
        out = out[:, :d_out]
    return out


def init_mlp_params(key, input_dim, output_dim, hidden=128, dtype=jnp.float32):
    """Deterministic synthetic init mimicking nn.Linear's uniform(-1/sqrt(fan_in), 1/sqrt(fan_in))."""
    k1, k2, k3, k4 = jax.random.split(key, 4)
    bound1 = 1.0 / jnp.sqrt(input_dim)
    bound2 = 1.0 / jnp.sqrt(hidden)
    # Stored already transposed: (in_features, out_features).
    w1 = jax.random.uniform(k1, (input_dim, hidden), dtype, -bound1, bound1)
    b1 = jax.random.uniform(k2, (1, hidden), dtype, -bound1, bound1)
    w2 = jax.random.uniform(k3, (hidden, output_dim), dtype, -bound2, bound2)
    b2 = jax.random.uniform(k4, (1, output_dim), dtype, -bound2, bound2)
    return w1, b1, w2, b2


if __name__ == "__main__":
    key = jax.random.PRNGKey(0)
    input_dim, output_dim = 32, 16
    kx1, kx2, kp = jax.random.split(key, 3)

    w1, b1, w2, b2 = init_mlp_params(kp, input_dim, output_dim)

    def ref_fn(x):
        # Reference in plain JAX (same math as the PyTorch forward, f32).
        return jnp.maximum(x @ w1 + b1, 0.0) @ w2 + b2

    # Small batch: single full-batch tile, no padding anywhere.
    x_small = jax.random.normal(kx1, (8, input_dim), jnp.float32)

    out_f32 = jax.block_until_ready(
        mlp_forward(x_small, w1, b1, w2, b2, compute_dtype=jnp.float32)
    )
    assert out_f32.shape == (8, output_dim)
    assert jnp.allclose(out_f32, ref_fn(x_small), atol=1e-5, rtol=1e-5)

    out_bf16 = jax.block_until_ready(mlp_forward(x_small, w1, b1, w2, b2))
    assert out_bf16.shape == (8, output_dim)
    assert jnp.allclose(out_bf16, ref_fn(x_small), atol=5e-2, rtol=5e-2)

    # Non-divisible batch: exercises the cdiv grid + masked partial edge block
    # (no wrapper-side pad or slice-back of the batch dimension).
    x_big = jax.random.normal(kx2, (300, input_dim), jnp.float32)
    out_big = jax.block_until_ready(
        mlp_forward(x_big, w1, b1, w2, b2, compute_dtype=jnp.float32)
    )
    assert out_big.shape == (300, output_dim)
    assert jnp.allclose(out_big, ref_fn(x_big), atol=1e-5, rtol=1e-5)

    print("KERNEL_OK")
</pallas_src>

<mosaic_0001>
module attributes {stable_mosaic.version = 11 : i64} {
  func.func @_mlp_kernel(%arg0: i32, %arg1: memref<8x32xf32, #tpu.memory_space<vmem>>, %arg2: memref<32x128xf32, #tpu.memory_space<vmem>>, %arg3: memref<1x128xf32, #tpu.memory_space<vmem>>, %arg4: memref<128x16xf32, #tpu.memory_space<vmem>>, %arg5: memref<1x16xf32, #tpu.memory_space<vmem>>, %arg6: memref<8x16xf32, #tpu.memory_space<vmem>>) attributes {dimension_semantics = [#tpu.dimension_semantics<parallel>], iteration_bounds = array<i64: 1>, scalar_prefetch = 0 : i64, scratch_operands = 0 : i64, tpu.core_type = #tpu.core_type<tc>, window_params = [{transform_indices = @transform_0, window_bounds = array<i64: 8, 32>}, {pipeline_mode = #tpu.pipeline_mode<synchronous>, transform_indices = @transform_1, window_bounds = array<i64: 32, 128>}, {pipeline_mode = #tpu.pipeline_mode<synchronous>, transform_indices = @transform_2, window_bounds = array<i64: 1, 128>}, {pipeline_mode = #tpu.pipeline_mode<synchronous>, transform_indices = @transform_3, window_bounds = array<i64: 128, 16>}, {pipeline_mode = #tpu.pipeline_mode<synchronous>, transform_indices = @transform_4, window_bounds = array<i64: 1, 16>}, {transform_indices = @transform_5, window_bounds = array<i64: 8, 16>}]} {
    %c0 = arith.constant 0 : index
    %c0_0 = arith.constant 0 : index
    %0 = vector.load %arg1[%c0, %c0_0] : memref<8x32xf32, #tpu.memory_space<vmem>>, vector<8x32xf32>
    %c0_1 = arith.constant 0 : index
    %c0_2 = arith.constant 0 : index
    %1 = vector.load %arg2[%c0_1, %c0_2] : memref<32x128xf32, #tpu.memory_space<vmem>>, vector<32x128xf32>
    %cst = arith.constant dense<0.000000e+00> : vector<8x128xf32>
    %2 = tpu.matmul %0, %1, %cst {dimension_numbers = #tpu.dot_dimension_numbers<[1], [0], [0], [1], [0, 0, 1, 1], [], []>} : vector<8x32xf32>, vector<32x128xf32>, vector<8x128xf32> -> vector<8x128xf32>
    %c0_3 = arith.constant 0 : index
    %c0_4 = arith.constant 0 : index
    %3 = vector.load %arg3[%c0_3, %c0_4] : memref<1x128xf32, #tpu.memory_space<vmem>>, vector<1x128xf32>
    %4 = vector.broadcast %3 : vector<1x128xf32> to vector<8x128xf32>
    %5 = arith.addf %2, %4 : vector<8x128xf32>
    %cst_5 = arith.constant 0.000000e+00 : f32
    %6 = vector.broadcast %cst_5 : f32 to vector<8x128xf32>
    %7 = arith.maximumf %5, %6 : vector<8x128xf32>
    %c0_6 = arith.constant 0 : index
    %c0_7 = arith.constant 0 : index
    %8 = vector.load %arg4[%c0_6, %c0_7] : memref<128x16xf32, #tpu.memory_space<vmem>>, vector<128x16xf32>
    %cst_8 = arith.constant dense<0.000000e+00> : vector<8x16xf32>
    %9 = tpu.matmul %7, %8, %cst_8 {dimension_numbers = #tpu.dot_dimension_numbers<[1], [0], [0], [1], [0, 0, 1, 1], [], []>} : vector<8x128xf32>, vector<128x16xf32>, vector<8x16xf32> -> vector<8x16xf32>
    %c0_9 = arith.constant 0 : index
    %c0_10 = arith.constant 0 : index
    %10 = vector.load %arg5[%c0_9, %c0_10] : memref<1x16xf32, #tpu.memory_space<vmem>>, vector<1x16xf32>
    %11 = vector.broadcast %10 : vector<1x16xf32> to vector<8x16xf32>
    %12 = arith.addf %9, %11 : vector<8x16xf32>
    %c0_11 = arith.constant 0 : index
    %c0_12 = arith.constant 0 : index
    %13 = vector.load %arg6[%c0_11, %c0_12] : memref<8x16xf32, #tpu.memory_space<vmem>>, vector<8x16xf32>
    tpu.vector_store %arg6[%c0_11, %c0_12], %12 {strides = array<i32>} : memref<8x16xf32, #tpu.memory_space<vmem>>, vector<8x16xf32>,
    return
  }
  func.func @transform_0(%arg0: i32) -> (i32, i32) {
    %c0_i32 = arith.constant 0 : i32
    %c0_i32_0 = arith.constant 0 : i32
    return %arg0, %c0_i32 : i32, i32
  }
  func.func @transform_1(%arg0: i32) -> (i32, i32) {
    %c0_i32 = arith.constant 0 : i32
    %c0_i32_0 = arith.constant 0 : i32
    %c0_i32_1 = arith.constant 0 : i32
    return %c0_i32, %c0_i32_0 : i32, i32
  }
  func.func @transform_2(%arg0: i32) -> (i32, i32) {
    %c0_i32 = arith.constant 0 : i32
    %c0_i32_0 = arith.constant 0 : i32
    %c0_i32_1 = arith.constant 0 : i32
    return %c0_i32, %c0_i32_0 : i32, i32
  }
  func.func @transform_3(%arg0: i32) -> (i32, i32) {
    %c0_i32 = arith.constant 0 : i32
    %c0_i32_0 = arith.constant 0 : i32
    %c0_i32_1 = arith.constant 0 : i32
    return %c0_i32, %c0_i32_0 : i32, i32
  }
  func.func @transform_4(%arg0: i32) -> (i32, i32) {
    %c0_i32 = arith.constant 0 : i32
    %c0_i32_0 = arith.constant 0 : i32
    %c0_i32_1 = arith.constant 0 : i32
    return %c0_i32, %c0_i32_0 : i32, i32
  }
  func.func @transform_5(%arg0: i32) -> (i32, i32) {
    %c0_i32 = arith.constant 0 : i32
    %c0_i32_0 = arith.constant 0 : i32
    return %arg0, %c0_i32 : i32, i32
  }
}

</mosaic_0001>

<llo_original>
// kernel: mlp_forward.1
$region0: #{mlp_forward.1}
  #allocation0 [shape = 'u32[]', space=smem, size = 0x4, offset = 0x4, fixed_abs, tag = 'smem constant byte address 0x4 - core index']
  #allocation1 [shape = 'u32[144,128]{1,0:T(1,128)}', space=vmem, size = 0x12000, scoped, tag = 'internal scratch']
  %s0 = inlined_call_operand.vmem [shape: f32[8,32], index: 0, kind: input, shape index: {}]
  %s1 = inlined_call_operand.vmem [shape: f32[32,128], index: 1, kind: input, shape index: {}]
  %s2 = inlined_call_operand.vmem [shape: f32[1,128], index: 2, kind: input, shape index: {}]
  %s3 = inlined_call_operand.vmem [shape: f32[128,16], index: 3, kind: input, shape index: {}]
  %s4 = inlined_call_operand.vmem [shape: f32[1,16], index: 4, kind: input, shape index: {}]
  %s5 = inlined_call_operand.hbm [shape: f32[8,16], index: 5, kind: output, shape index: {}]
  %s6 = sld [smem:[#allocation0]]
  $region30: #{mlp_forward.1} parent=0
    _
  %s8 = ssub.s32 1, %s6
  %s9 = scalar_select 0, %s8, %s6
  $region1: #{mlp_forward.1} parent=0
    #allocation2 [shape = 'u8[4096]{0}', space=vmem, size = 0x1000, scoped, tag = 'output window, operand 0, single buffered']
    #allocation3 [shape = 's32[1]{0}', space=sflag, size = 0x4, scoped, tag = 'scoped memory for mlp_forward.1']
    %10 = vsyncpa [#allocation3], 0
    // Predicated region
    $region2: #{mlp_forward.1} parent=1 // pred_check
      _
    $region3: #{mlp_forward.1} parent=1 // pred_check_branch
      %12 = sbr.rel (0) target = $region5
    $region4: #{mlp_forward.1} parent=1 // pred_region
      _
    $region5: #{mlp_forward.1} parent=1 // pred_fallthru
      _
    // Predicated region
    $region6: #{mlp_forward.1} parent=1 // pred_check
      _
    $region7: #{mlp_forward.1} parent=1 // pred_check_branch
      %14 = sbr.rel (0) target = $region9
    $region8: #{mlp_forward.1} parent=1 // pred_region
      _
    $region9: #{mlp_forward.1} parent=1 // pred_fallthru
      _
    // Predicated region
    $region10: #{mlp_forward.1} parent=1 // pred_check
      _
    $region11: #{mlp_forward.1} parent=1 // pred_check_branch
      %16 = sbr.rel (0) target = $region13
    $region12: #{mlp_forward.1} parent=1 // pred_region
      _
    $region13: #{mlp_forward.1} parent=1 // pred_fallthru
      _
    // Predicated region
    $region14: #{mlp_forward.1} parent=1 // pred_check
      _
    $region15: #{mlp_forward.1} parent=1 // pred_check_branch
      %18 = sbr.rel (0) target = $region17
    $region16: #{mlp_forward.1} parent=1 // pred_region
      _
    $region17: #{mlp_forward.1} parent=1 // pred_fallthru
      _
    // Predicated region
    $region18: #{mlp_forward.1} parent=1 // pred_check
      _
    $region19: #{mlp_forward.1} parent=1 // pred_check_branch
      %20 = sbr.rel (0) target = $region21
    $region20: #{mlp_forward.1} parent=1 // pred_region
      _
    $region21: #{mlp_forward.1} parent=1 // pred_fallthru
      _
    %v21 = vld [vmem:[%s0] sm:$0xff]
    %v22 = vld [vmem:[%s1] sm:$0xff]
    %v23 = vld [vmem:[%s1 + $0x8] sm:$0xff]
    %v24 = vld [vmem:[%s1 + $0x10] sm:$0xff]
    %v25 = vld [vmem:[%s1 + $0x18] sm:$0xff]
    %v26 = vld [vmem:[%s2] sm:$0x1]
    %v28 = vlaneseq
    %v29 = vshrl.u32 %v28, 7
    %v30 = vsub.s32 0, %v29
    %v31 = vrot.slane %v26, %v30
    %vm33 = vcmask 261120
    %v35 = vsel %vm33, %v21, 0
    %37 = vmatprep.subr.mxu0 0.0
    %38 = vmatpush1.msra.mxu0 0.0
    %39 = vmatprep.subr.mxu0 0.0
    %40 = vmatpush1.msra.mxu0 0.0
    %41 = vmatprep.subr.mxu0 0.0
    %42 = vmatpush1.msra.mxu0 0.0
    %43 = vmatprep.subr.mxu0 0.0
    %44 = vmatpush1.msra.mxu0 0.0
    %45 = vmatprep.subr.mxu0 0.0
    %46 = vmatpush1.msra.mxu0 0.0
    %47 = vmatprep.subr.mxu0 0.0
    %48 = vmatpush1.msra.mxu0 0.0
    %49 = vmatprep.subr.mxu0 0.0
    %50 = vmatpush1.msra.mxu0 0.0
    %51 = vmatprep.subr.mxu0 0.0
    %52 = vmatpush1.msra.mxu0 0.0
    %53 = vmatprep.subr.mxu0 0.0
    %54 = vmatpush1.msra.mxu0 0.0
    %55 = vmatprep.subr.mxu0 0.0
    %56 = vmatpush1.msra.mxu0 0.0
    %57 = vmatprep.subr.mxu0 0.0
    %58 = vmatpush1.msra.mxu0 0.0
    %59 = vmatprep.subr.mxu0 0.0
    %60 = vmatpush1.msra.mxu0 0.0
    %61 = vmatprep.subr.mxu0 0.0
    %62 = vmatpush1.msra.mxu0 %v25
    %63 = vmatprep.subr.mxu0 0.0
    %64 = vmatpush1.msra.mxu0 %v24
    %65 = vmatprep.subr.mxu0 0.0
    %66 = vmatpush1.msra.mxu0 %v23
    %67 = vmatprep.subr.mxu0 0.0
    %68 = vmatpush1.msra.mxu0 %v22
    %69 = vmatprep.subr.mxu0 0.0
    %70 = vmatpush2.msra.mxu0 0.0
    %71 = vmatprep.subr.mxu0 0.0
    %72 = vmatpush2.msra.mxu0 0.0
    %73 = vmatprep.subr.mxu0 0.0
    %74 = vmatpush2.msra.mxu0 0.0
    %75 = vmatprep.subr.mxu0 0.0
    %76 = vmatpush2.msra.mxu0 0.0
    %77 = vmatprep.subr.mxu0 0.0
    %78 = vmatpush2.msra.mxu0 0.0
    %79 = vmatprep.subr.mxu0 0.0
    %80 = vmatpush2.msra.mxu0 0.0
    %81 = vmatprep.subr.mxu0 0.0
    %82 = vmatpush2.msra.mxu0 0.0
    %83 = vmatprep.subr.mxu0 0.0
    %84 = vmatpush2.msra.mxu0 0.0
    %85 = vmatprep.subr.mxu0 0.0
    %86 = vmatpush2.msra.mxu0 0.0
    %87 = vmatprep.subr.mxu0 0.0
    %88 = vmatpush2.msra.mxu0 0.0
    %89 = vmatprep.subr.mxu0 0.0
    %90 = vmatpush2.msra.mxu0 0.0
    %91 = vmatprep.subr.mxu0 0.0
    %92 = vmatpush2.msra.mxu0 0.0
    %93 = vmatprep.subr.mxu0 0.0
    %94 = vmatpush2.msra.mxu0 0.0
    %95 = vmatprep.subr.mxu0 0.0
    %96 = vmatpush2.msra.mxu0 0.0
    %97 = vmatprep.subr.mxu0 0.0
    %98 = vmatpush2.msra.mxu0 0.0
    %99 = vmatprep.subr.mxu0 0.0
    %100 = vmatpush2.msra.mxu0 0.0
    %101 = vmatprep.mubr.f32.mxu0 0.0
    %102 = vmatmul.mubr.f32.gmra.mxu0 %v35
    %v103 = vpop.f32.mrf.mxu0
    %v104 = vadd.f32 %v31, %v103
    %v105 = vpop.f32.mrf.mxu0
    %106 = vdwg.mxu0
    %v107 = vmax.f32 %v104, 0.0
    %v108 = vld [vmem:[%s3] sm:$0xff]
    %v109 = vld [vmem:[%s3 + $0x8] sm:$0xff]
    %v110 = vld [vmem:[%s3 + $0x10] sm:$0xff]
    %v111 = vld [vmem:[%s3 + $0x18] sm:$0xff]
    %v112 = vld [vmem:[%s3 + $0x20] sm:$0xff]
    %v113 = vld [vmem:[%s3 + $0x28] sm:$0xff]
    %v114 = vld [vmem:[%s3 + $0x30] sm:$0xff]
    %v115 = vld [vmem:[%s3 + $0x38] sm:$0xff]
    %v116 = vld [vmem:[%s3 + $0x40] sm:$0xff]
    %v117 = vld [vmem:[%s3 + $0x48] sm:$0xff]
    %v118 = vld [vmem:[%s3 + $0x50] sm:$0xff]
    %v119 = vld [vmem:[%s3 + $0x58] sm:$0xff]
    %v120 = vld [vmem:[%s3 + $0x60] sm:$0xff]
    %v121 = vld [vmem:[%s3 + $0x68] sm:$0xff]
    %v122 = vld [vmem:[%s3 + $0x70] sm:$0xff]
    %v123 = vld [vmem:[%s3 + $0x78] sm:$0xff]
    %v124 = vld [vmem:[%s4] sm:$0x1]
    %v126 = vlaneseq
    %v127 = vshrl.u32 %v126, 7
    %v128 = vsub.s32 0, %v127
    %v129 = vrot.slane %v124, %v128
    %131 = vmatprep.subr.mxu0 0.0
    %132 = vmatpush1.msra.mxu0 %v123
    %133 = vmatprep.subr.mxu0 0.0
    %134 = vmatpush1.msra.mxu0 %v122
    %135 = vmatprep.subr.mxu0 0.0
    %136 = vmatpush1.msra.mxu0 %v121
    %137 = vmatprep.subr.mxu0 0.0
    %138 = vmatpush1.msra.mxu0 %v120
    %139 = vmatprep.subr.mxu0 0.0
    %140 = vmatpush1.msra.mxu0 %v119
    %141 = vmatprep.subr.mxu0 0.0
    %142 = vmatpush1.msra.mxu0 %v118
    %143 = vmatprep.subr.mxu0 0.0
    %144 = vmatpush1.msra.mxu0 %v117
    %145 = vmatprep.subr.mxu0 0.0
    %146 = vmatpush1.msra.mxu0 %v116
    %147 = vmatprep.subr.mxu0 0.0
    %148 = vmatpush1.msra.mxu0 %v115
    %149 = vmatprep.subr.mxu0 0.0
    %150 = vmatpush1.msra.mxu0 %v114
    %151 = vmatprep.subr.mxu0 0.0
    %152 = vmatpush1.msra.mxu0 %v113
    %153 = vmatprep.subr.mxu0 0.0
    %154 = vmatpush1.msra.mxu0 %v112
    %155 = vmatprep.subr.mxu0 0.0
    %156 = vmatpush1.msra.mxu0 %v111
    %157 = vmatprep.subr.mxu0 0.0
    %158 = vmatpush1.msra.mxu0 %v110
    %159 = vmatprep.subr.mxu0 0.0
    %160 = vmatpush1.msra.mxu0 %v109
    %161 = vmatprep.subr.mxu0 0.0
    %162 = vmatpush1.msra.mxu0 %v108
    %163 = vmatprep.subr.mxu0 0.0
    %164 = vmatpush2.msra.mxu0 0.0
    %165 = vmatprep.subr.mxu0 0.0
    %166 = vmatpush2.msra.mxu0 0.0
    %167 = vmatprep.subr.mxu0 0.0
    %168 = vmatpush2.msra.mxu0 0.0
    %169 = vmatprep.subr.mxu0 0.0
    %170 = vmatpush2.msra.mxu0 0.0
    %171 = vmatprep.subr.mxu0 0.0
    %172 = vmatpush2.msra.mxu0 0.0
    %173 = vmatprep.subr.mxu0 0.0
    %174 = vmatpush2.msra.mxu0 0.0
    %175 = vmatprep.subr.mxu0 0.0
    %176 = vmatpush2.msra.mxu0 0.0
    %177 = vmatprep.subr.mxu0 0.0
    %178 = vmatpush2.msra.mxu0 0.0
    %179 = vmatprep.subr.mxu0 0.0
    %180 = vmatpush2.msra.mxu0 0.0
    %181 = vmatprep.subr.mxu0 0.0
    %182 = vmatpush2.msra.mxu0 0.0
    %183 = vmatprep.subr.mxu0 0.0
    %184 = vmatpush2.msra.mxu0 0.0
    %185 = vmatprep.subr.mxu0 0.0
    %186 = vmatpush2.msra.mxu0 0.0
    %187 = vmatprep.subr.mxu0 0.0
    %188 = vmatpush2.msra.mxu0 0.0
    %189 = vmatprep.subr.mxu0 0.0
    %190 = vmatpush2.msra.mxu0 0.0
    %191 = vmatprep.subr.mxu0 0.0
    %192 = vmatpush2.msra.mxu0 0.0
    %193 = vmatprep.subr.mxu0 0.0
    %194 = vmatpush2.msra.mxu0 0.0
    %195 = vmatprep.mubr.f32.mxu0 0.0
    %196 = vmatmul.mubr.f32.gmra.mxu0 %v107
    %v197 = vpop.f32.mrf.mxu0
    %v198 = vadd.f32 %v129, %v197
    %v199 = vpop.f32.mrf.mxu0
    %200 = vdwg.mxu0
    %vm201 = vcmask 130048
    %202 = vst.msk [vmem:[#allocation2] sm:$0xff] %vm201, %v198
    // Predicated region
    $region22: #{mlp_forward.1} parent=1 // pred_check
      _
    $region23: #{mlp_forward.1} parent=1 // pred_check_branch
      %204 = sbr.rel (0) target = $region25
    $region24: #{mlp_forward.1} parent=1 // pred_region
      %s206 = ssub.s32 128, 128
      %207 = vsyncadd [#allocation3], %s206
      %s209 = sshll.u32 [#allocation2], 4
      %s210 = int_to_ptr.vmem [resolvable:$true] %s209
      %212 = dma.vmem_to_hbm [thread:$0]  %s210, 128, %s5, [#allocation3]
    $region25: #{mlp_forward.1} parent=1 // pred_fallthru
      _
    // Predicated region
    $region26: #{mlp_forward.1} parent=1 // pred_check
      _
    $region27: #{mlp_forward.1} parent=1 // pred_check_branch
      %214 = sbr.rel (0) target = $region29
    $region28: #{mlp_forward.1} parent=1 // pred_region
      %215 = dma.done [#allocation3], 128
    $region29: #{mlp_forward.1} parent=1 // pred_fallthru
      _
    %216 = vsyncpa [#allocation3], 1

</llo_original>
